<compile_context>
chip_gen: v7x
topology: tpu7x:2x2x1
jax: 0.10.0
libtpu: 0.0.40
codegen_flags: <defaults>
</compile_context>

<pallas_src>
import math

import jax
import jax.numpy as jnp
from jax.experimental import pallas as pl
from jax.experimental.pallas import tpu as pltpu

EPS = 1e-5
LANE = 128      # pad Cout to a multiple of the 128-wide lane dim (dense vst / MXU)
SUBLANE = 8     # sublane alignment for K dims and the stats block
TM_MAX = 256    # im2col rows per grid step (fits comfortably in scoped VMEM)


def _round_up(x, m):
    return ((x + m - 1) // m) * m


def _compiler_params():
    # Prefer the current name, fall back for older jax versions.
    cls = getattr(pltpu, "CompilerParams", None) or getattr(pltpu, "TPUCompilerParams", None)
    if cls is None:
        return None
    return cls(dimension_semantics=("parallel",),
               vmem_limit_bytes=48 * 1024 * 1024)


# ---------------------------------------------------------------------------
# Pallas kernels
# ---------------------------------------------------------------------------
def _matmul_stats_kernel(p_ref, w_ref, y_ref, st_ref):
    # y = P @ W on the MXU (bf16 inputs, f32 accumulation) plus per-channel
    # partial sum / sum-of-squares for the cross-tile BatchNorm reduction.
    y = jnp.dot(p_ref[...], w_ref[...], preferred_element_type=jnp.float32)
    y_ref[...] = y
    s1 = jnp.sum(y, axis=0, keepdims=True)        # (1, C)
    s2 = jnp.sum(y * y, axis=0, keepdims=True)    # (1, C)
    row = jax.lax.broadcasted_iota(jnp.int32, st_ref.shape, 0)   # (8, C)
    st_ref[...] = jnp.where(row == 0, s1, 0.0) + jnp.where(row == 1, s2, 0.0)


def _affine_relu_kernel(y_ref, sc_ref, sh_ref, o_ref):
    # BN folded to a single FMA (scale/shift precomputed) + ReLU.
    o_ref[...] = jnp.maximum(y_ref[...] * sc_ref[...] + sh_ref[...], 0.0).astype(o_ref.dtype)


def _tail_1x1_kernel(y2_ref, ysc_ref, s2_ref, t2_ref, ss_ref, ts_ref, o_ref):
    # out = relu(BN2(C2) + BNshortcut(shortcut))
    a = y2_ref[...] * s2_ref[...] + t2_ref[...]
    b = ysc_ref[...] * ss_ref[...] + ts_ref[...]
    o_ref[...] = jnp.maximum(a + b, 0.0).astype(o_ref.dtype)


def _tail_identity_kernel(y2_ref, sc_ref, s2_ref, t2_ref, o_ref):
    # out = relu(BN2(C2) + x)
    a = y2_ref[...] * s2_ref[...] + t2_ref[...]
    o_ref[...] = jnp.maximum(a + sc_ref[...], 0.0).astype(o_ref.dtype)


# ---------------------------------------------------------------------------
# Launchers (M-tiled grid, weights / BN vectors resident via constant index_map)
# ---------------------------------------------------------------------------
def _row_spec(tm, ncols):
    return pl.BlockSpec((tm, ncols), lambda i: (i, 0))


def _const_spec(shape):
    return pl.BlockSpec(shape, lambda i: (0, 0))


def matmul_with_stats(p, w, tm):
    mp, k = p.shape
    c = w.shape[1]
    grid_m = mp // tm
    return pl.pallas_call(
        _matmul_stats_kernel,
        out_shape=(jax.ShapeDtypeStruct((mp, c), jnp.float32),
                   jax.ShapeDtypeStruct((grid_m * SUBLANE, c), jnp.float32)),
        grid=(grid_m,),
        in_specs=[_row_spec(tm, k), _const_spec((k, c))],
        out_specs=(_row_spec(tm, c), pl.BlockSpec((SUBLANE, c), lambda i: (i, 0))),
        compiler_params=_compiler_params(),
    )(p, w)


def affine_relu(y, scale, shift, tm, out_dtype):
    mp, c = y.shape
    return pl.pallas_call(
        _affine_relu_kernel,
        out_shape=jax.ShapeDtypeStruct((mp, c), out_dtype),
        grid=(mp // tm,),
        in_specs=[_row_spec(tm, c), _const_spec((1, c)), _const_spec((1, c))],
        out_specs=_row_spec(tm, c),
        compiler_params=_compiler_params(),
    )(y, scale, shift)


def tail_1x1(y2, ysc, s2, t2, ssc, tsc, tm):
    mp, c = y2.shape
    return pl.pallas_call(
        _tail_1x1_kernel,
        out_shape=jax.ShapeDtypeStruct((mp, c), jnp.float32),
        grid=(mp // tm,),
        in_specs=[_row_spec(tm, c), _row_spec(tm, c),
                  _const_spec((1, c)), _const_spec((1, c)),
                  _const_spec((1, c)), _const_spec((1, c))],
        out_specs=_row_spec(tm, c),
        compiler_params=_compiler_params(),
    )(y2, ysc, s2, t2, ssc, tsc)


def tail_identity(y2, sc, s2, t2, tm):
    mp, c = y2.shape
    return pl.pallas_call(
        _tail_identity_kernel,
        out_shape=jax.ShapeDtypeStruct((mp, c), jnp.float32),
        grid=(mp // tm,),
        in_specs=[_row_spec(tm, c), _row_spec(tm, c),
                  _const_spec((1, c)), _const_spec((1, c))],
        out_specs=_row_spec(tm, c),
        compiler_params=_compiler_params(),
    )(y2, sc, s2, t2)


# ---------------------------------------------------------------------------
# Wrapper-side glue
# ---------------------------------------------------------------------------
def _fold_bn_stats(stats, count, gamma, beta):
    # stats: [grid*8, C]; row 0 of each 8-row block = per-tile sum, row 1 = sumsq.
    total = jnp.sum(stats[0::SUBLANE], axis=0, keepdims=True)
    total2 = jnp.sum(stats[1::SUBLANE], axis=0, keepdims=True)
    mean = total / count
    var = jnp.maximum(total2 / count - mean * mean, 0.0)    # biased var (training mode)
    scale = gamma * jax.lax.rsqrt(var + EPS)
    shift = beta - mean * scale
    return scale, shift


def _pad2d(a, rows, cols):
    return jnp.pad(a, ((0, rows - a.shape[0]), (0, cols - a.shape[1])))


def im2col(x_nhwc, ksize, stride, pad):
    n, h, w, c = x_nhwc.shape
    xp = jnp.pad(x_nhwc, ((0, 0), (pad, pad), (pad, pad), (0, 0)))
    ho = (h + 2 * pad - ksize) // stride + 1
    wo = (w + 2 * pad - ksize) // stride + 1
    cols = []
    for dy in range(ksize):
        for dx in range(ksize):
            cols.append(xp[:, dy:dy + stride * ho:stride, dx:dx + stride * wo:stride, :])
    patches = jnp.stack(cols, axis=3)                     # [N, Ho, Wo, k*k, C]
    return patches.reshape(n * ho * wo, ksize * ksize * c), (n, ho, wo)


# ---------------------------------------------------------------------------
# Parameter construction (mirrors SimpleBlock.__init__ / init_layer)
# ---------------------------------------------------------------------------
def init_simple_block_params(key, indim, outdim, half_res):
    k1, k2, k3 = jax.random.split(key, 3)
    cp = _round_up(outdim, LANE)

    std3 = math.sqrt(2.0 / float(3 * 3 * outdim))
    w1 = jax.random.normal(k1, (outdim, indim, 3, 3), jnp.float32) * std3
    w2 = jax.random.normal(k2, (outdim, outdim, 3, 3), jnp.float32) * std3

    # im2col layout [(kh*kw*Cin), Cout]; K padded to multiple of 8, Cout to 128.
    k1p = _round_up(9 * indim, SUBLANE)
    w1_mat = _pad2d(jnp.transpose(w1, (2, 3, 1, 0)).reshape(9 * indim, outdim), k1p, cp)

    # conv2 consumes the channel-padded activation, so K2 = 9 * cp directly.
    w2_full = jnp.zeros((3, 3, cp, cp), jnp.float32)
    w2_full = w2_full.at[:, :, :outdim, :outdim].set(jnp.transpose(w2, (2, 3, 1, 0)))
    w2_mat = w2_full.reshape(9 * cp, cp)

    params = {
        "w1": w1_mat.astype(jnp.bfloat16),
        "w2": w2_mat.astype(jnp.bfloat16),
        "g1": jnp.ones((1, cp), jnp.float32), "b1": jnp.zeros((1, cp), jnp.float32),
        "g2": jnp.ones((1, cp), jnp.float32), "b2": jnp.zeros((1, cp), jnp.float32),
        # PyTorch-layout (OIHW) copies used only by the reference check below.
        "w1_oihw": w1, "w2_oihw": w2,
    }
    if indim != outdim:
        std1 = math.sqrt(2.0 / float(1 * 1 * outdim))
        wsc = jax.random.normal(k3, (outdim, indim, 1, 1), jnp.float32) * std1
        kscp = _round_up(indim, SUBLANE)
        params["wsc"] = _pad2d(wsc.reshape(outdim, indim).T, kscp, cp).astype(jnp.bfloat16)
        params["gsc"] = jnp.ones((1, cp), jnp.float32)
        params["bsc"] = jnp.zeros((1, cp), jnp.float32)
        params["wsc_oihw"] = wsc
    return params


# ---------------------------------------------------------------------------
# Forward pass
# ---------------------------------------------------------------------------
def simple_block_forward(x_nchw, params, indim, outdim, half_res):
    if indim == outdim:
        assert not half_res, "identity shortcut requires stride 1 (as in the PyTorch module)"
    cp = _round_up(outdim, LANE)
    stride1 = 2 if half_res else 1

    x = jnp.transpose(x_nchw, (0, 2, 3, 1)).astype(jnp.float32)     # NHWC once
    x_bf = x.astype(jnp.bfloat16)

    # ---- C1 (3x3, stride 1|2, pad 1): tiled MXU matmul + partial BN stats
    p1, (n, ho, wo) = im2col(x_bf, 3, stride1, 1)
    m = n * ho * wo
    tm = min(TM_MAX, _round_up(m, SUBLANE))
    mp = _round_up(m, tm)
    p1 = _pad2d(p1, mp, params["w1"].shape[0])

    y1, st1 = matmul_with_stats(p1, params["w1"], tm)
    scale1, shift1 = _fold_bn_stats(st1, float(m), params["g1"], params["b1"])
    h1 = affine_relu(y1, scale1, shift1, tm, jnp.bfloat16)          # BN1 + ReLU, bf16
    h1 = h1[:m].reshape(n, ho, wo, cp)

    # ---- C2 (3x3, stride 1, pad 1)
    p2, _ = im2col(h1, 3, 1, 1)
    p2 = _pad2d(p2, mp, params["w2"].shape[0])
    y2, st2 = matmul_with_stats(p2, params["w2"], tm)
    scale2, shift2 = _fold_bn_stats(st2, float(m), params["g2"], params["b2"])

    # ---- shortcut + add + ReLU
    if indim != outdim:
        sc_in = x_bf[:, ::stride1, ::stride1, :].reshape(m, indim)
        sc_in = _pad2d(sc_in, mp, params["wsc"].shape[0])
        ysc, stsc = matmul_with_stats(sc_in, params["wsc"], tm)
        ssc, tsc = _fold_bn_stats(stsc, float(m), params["gsc"], params["bsc"])
        out = tail_1x1(y2, ysc, scale2, shift2, ssc, tsc, tm)
    else:
        sc = _pad2d(x.reshape(m, indim), mp, cp)
        out = tail_identity(y2, sc, scale2, shift2, tm)

    out = out[:m, :outdim].reshape(n, ho, wo, outdim)
    return jnp.transpose(out, (0, 3, 1, 2))                          # back to NCHW


# ---------------------------------------------------------------------------
# Pure-JAX reference (PyTorch semantics) for a sanity check in __main__
# ---------------------------------------------------------------------------
def reference_forward(x_nchw, params, indim, outdim, half_res):
    q = lambda a: a.astype(jnp.bfloat16).astype(jnp.float32)   # match kernel quantization
    stride1 = 2 if half_res else 1

    def conv(x, w, stride, pad):
        return jax.lax.conv_general_dilated(
            x, w, window_strides=(stride, stride),
            padding=((pad, pad), (pad, pad)),
            dimension_numbers=("NCHW", "OIHW", "NCHW"))

    def bn(y):  # training mode, gamma=1, beta=0
        mean = jnp.mean(y, axis=(0, 2, 3), keepdims=True)
        var = jnp.mean((y - mean) ** 2, axis=(0, 2, 3), keepdims=True)
        return (y - mean) * jax.lax.rsqrt(var + EPS)

    x = x_nchw.astype(jnp.float32)
    h = jnp.maximum(bn(conv(q(x), q(params["w1_oihw"]), stride1, 1)), 0.0)
    y2 = bn(conv(q(h), q(params["w2_oihw"]), 1, 1))
    if indim != outdim:
        sc = bn(conv(q(x), q(params["wsc_oihw"]), stride1, 0))
    else:
        sc = x
    return jnp.maximum(y2 + sc, 0.0)


# ---------------------------------------------------------------------------
if __name__ == "__main__":
    key = jax.random.PRNGKey(0)
    kx, kp = jax.random.split(key)

    # 1x1-shortcut + stride-2 path
    indim, outdim, half_res = 4, 8, True
    x = jax.random.normal(kx, (2, indim, 16, 16), jnp.float32)      # NCHW like PyTorch
    params = init_simple_block_params(kp, indim, outdim, half_res)
    y = simple_block_forward(x, params, indim, outdim, half_res)
    jax.block_until_ready(y)
    assert y.shape == (2, outdim, 8, 8), y.shape
    err = float(jnp.max(jnp.abs(y - reference_forward(x, params, indim, outdim, half_res))))
    assert err < 5e-2, f"1x1-shortcut path mismatch vs reference: {err}"

    # identity-shortcut path (indim == outdim, stride 1)
    params_id = init_simple_block_params(kp, outdim, outdim, False)
    x_id = jax.random.normal(kx, (2, outdim, 16, 16), jnp.float32)
    y_id = simple_block_forward(x_id, params_id, outdim, outdim, False)
    jax.block_until_ready(y_id)
    assert y_id.shape == (2, outdim, 16, 16), y_id.shape
    err_id = float(jnp.max(jnp.abs(
        y_id - reference_forward(x_id, params_id, outdim, outdim, False))))
    assert err_id < 5e-2, f"identity path mismatch vs reference: {err_id}"

    print("KERNEL_OK")
</pallas_src>

<mosaic_0001>
module attributes {stable_mosaic.version = 11 : i64} {
  func.func @_matmul_stats_kernel(%arg0: i32, %arg1: memref<128x40xbf16, #tpu.memory_space<vmem>>, %arg2: memref<40x128xbf16, #tpu.memory_space<vmem>>, %arg3: memref<128x128xf32, #tpu.memory_space<vmem>>, %arg4: memref<8x128xf32, #tpu.memory_space<vmem>>) attributes {dimension_semantics = [#tpu.dimension_semantics<parallel>], iteration_bounds = array<i64: 1>, scalar_prefetch = 0 : i64, scratch_operands = 0 : i64, tpu.core_type = #tpu.core_type<tc>, window_params = [{transform_indices = @transform_0, window_bounds = array<i64: 128, 40>}, {pipeline_mode = #tpu.pipeline_mode<synchronous>, transform_indices = @transform_1, window_bounds = array<i64: 40, 128>}, {transform_indices = @transform_2, window_bounds = array<i64: 128, 128>}, {transform_indices = @transform_3, window_bounds = array<i64: 8, 128>}]} {
    %c0 = arith.constant 0 : index
    %c0_0 = arith.constant 0 : index
    %0 = vector.load %arg1[%c0, %c0_0] : memref<128x40xbf16, #tpu.memory_space<vmem>>, vector<128x40xbf16>
    %c0_1 = arith.constant 0 : index
    %c0_2 = arith.constant 0 : index
    %1 = vector.load %arg2[%c0_1, %c0_2] : memref<40x128xbf16, #tpu.memory_space<vmem>>, vector<40x128xbf16>
    %cst = arith.constant dense<0.000000e+00> : vector<128x128xf32>
    %2 = tpu.matmul %0, %1, %cst {dimension_numbers = #tpu.dot_dimension_numbers<[1], [0], [0], [1], [0, 0, 1, 1], [], []>} : vector<128x40xbf16>, vector<40x128xbf16>, vector<128x128xf32> -> vector<128x128xf32>
    %c0_3 = arith.constant 0 : index
    %c0_4 = arith.constant 0 : index
    %3 = vector.load %arg3[%c0_3, %c0_4] : memref<128x128xf32, #tpu.memory_space<vmem>>, vector<128x128xf32>
    tpu.vector_store %arg3[%c0_3, %c0_4], %2 {strides = array<i32>} : memref<128x128xf32, #tpu.memory_space<vmem>>, vector<128x128xf32>,
    %cst_5 = arith.constant dense<0.000000e+00> : vector<128xf32>
    %4 = vector.multi_reduction <add>, %2, %cst_5 [0] : vector<128x128xf32> to vector<128xf32>
    %5 = vector.shape_cast %4 : vector<128xf32> to vector<1x128xf32>
    %6 = arith.mulf %2, %2 : vector<128x128xf32>
    %cst_6 = arith.constant dense<0.000000e+00> : vector<128xf32>
    %7 = vector.multi_reduction <add>, %6, %cst_6 [0] : vector<128x128xf32> to vector<128xf32>
    %8 = vector.shape_cast %7 : vector<128xf32> to vector<1x128xf32>
    %9 = tpu.iota {dimensions = array<i32: 0>} : vector<8x128xi32>
    %c0_i32 = arith.constant 0 : i32
    %10 = vector.broadcast %c0_i32 : i32 to vector<8x128xi32>
    %11 = arith.cmpi eq, %9, %10 : vector<8x128xi32>
    %cst_7 = arith.constant 0.000000e+00 : f32
    %12 = vector.shape_cast %5 : vector<1x128xf32> to vector<1x128xf32>
    %13 = vector.broadcast %12 : vector<1x128xf32> to vector<8x128xf32>
    %14 = vector.broadcast %cst_7 : f32 to vector<8x128xf32>
    %15 = arith.select %11, %13, %14 : vector<8x128xi1>, vector<8x128xf32>
    %c1_i32 = arith.constant 1 : i32
    %16 = vector.broadcast %c1_i32 : i32 to vector<8x128xi32>
    %17 = arith.cmpi eq, %9, %16 : vector<8x128xi32>
    %cst_8 = arith.constant 0.000000e+00 : f32
    %18 = vector.shape_cast %8 : vector<1x128xf32> to vector<1x128xf32>
    %19 = vector.broadcast %18 : vector<1x128xf32> to vector<8x128xf32>
    %20 = vector.broadcast %cst_8 : f32 to vector<8x128xf32>
    %21 = arith.select %17, %19, %20 : vector<8x128xi1>, vector<8x128xf32>
    %22 = arith.addf %15, %21 : vector<8x128xf32>
    %c0_9 = arith.constant 0 : index
    %c0_10 = arith.constant 0 : index
    %23 = vector.load %arg4[%c0_9, %c0_10] : memref<8x128xf32, #tpu.memory_space<vmem>>, vector<8x128xf32>
    tpu.vector_store %arg4[%c0_9, %c0_10], %22 {strides = array<i32>} : memref<8x128xf32, #tpu.memory_space<vmem>>, vector<8x128xf32>,
    return
  }
  func.func @transform_0(%arg0: i32) -> (i32, i32) {
    %c0_i32 = arith.constant 0 : i32
    %c0_i32_0 = arith.constant 0 : i32
    return %arg0, %c0_i32 : i32, i32
  }
  func.func @transform_1(%arg0: i32) -> (i32, i32) {
    %c0_i32 = arith.constant 0 : i32
    %c0_i32_0 = arith.constant 0 : i32
    %c0_i32_1 = arith.constant 0 : i32
    return %c0_i32, %c0_i32_0 : i32, i32
  }
  func.func @transform_2(%arg0: i32) -> (i32, i32) {
    %c0_i32 = arith.constant 0 : i32
    %c0_i32_0 = arith.constant 0 : i32
    return %arg0, %c0_i32 : i32, i32
  }
  func.func @transform_3(%arg0: i32) -> (i32, i32) {
    %c0_i32 = arith.constant 0 : i32
    %c0_i32_0 = arith.constant 0 : i32
    return %arg0, %c0_i32 : i32, i32
  }
}

</mosaic_0001>

<llo_original>
// kernel: tpu_custom_call.1
$region0: #{tpu_custom_call.1}
  #allocation0 [shape = 'u32[]', space=smem, size = 0x4, offset = 0x4, fixed_abs, tag = 'smem constant byte address 0x4 - core index']
  #allocation1 [shape = 'u32[144,128]{1,0:T(1,128)}', space=vmem, size = 0x12000, scoped, tag = 'internal scratch']
  %s0 = inlined_call_operand.vmem [shape: bf16[128,40], index: 0, kind: input, shape index: {}]
  %s1 = inlined_call_operand.vmem [shape: bf16[40,128], index: 1, kind: input, shape index: {}]
  %s2 = inlined_call_operand.hbm [shape: f32[128,128], index: 2, kind: output, shape index: {0}]
  %s3 = inlined_call_operand.hbm [shape: f32[8,128], index: 3, kind: output, shape index: {1}]
  %4 = xla_tuple %s2, %s3
  %s5 = sld [smem:[#allocation0]]
  $region26: #{tpu_custom_call.1} parent=0
    _
  %s7 = ssub.s32 1, %s5
  %s8 = scalar_select 0, %s7, %s5
  $region1: #{tpu_custom_call.1} parent=0
    #allocation2 [shape = 'u8[65536]{0}', space=vmem, size = 0x10000, scoped, tag = 'output window, operand 0, single buffered']
    #allocation3 [shape = 's32[1]{0}', space=sflag, size = 0x4, scoped, tag = 'scoped memory for tpu_custom_call.1']
    #allocation4 [shape = 'u8[4096]{0}', space=vmem, size = 0x1000, scoped, tag = 'output window, operand 1, single buffered']
    #allocation5 [shape = 's32[1]{0}', space=sflag, size = 0x4, scoped, tag = 'scoped memory for tpu_custom_call.1']
    %9 = vsyncpa [#allocation3], 0
    %10 = vsyncpa [#allocation5], 0
    // Predicated region
    $region2: #{tpu_custom_call.1} parent=1 // pred_check
      _
    $region3: #{tpu_custom_call.1} parent=1 // pred_check_branch
      %12 = sbr.rel (0) target = $region5
    $region4: #{tpu_custom_call.1} parent=1 // pred_region
      _
    $region5: #{tpu_custom_call.1} parent=1 // pred_fallthru
      _
    // Predicated region
    $region6: #{tpu_custom_call.1} parent=1 // pred_check
      _
    $region7: #{tpu_custom_call.1} parent=1 // pred_check_branch
      %14 = sbr.rel (0) target = $region9
    $region8: #{tpu_custom_call.1} parent=1 // pred_region
      _
    $region9: #{tpu_custom_call.1} parent=1 // pred_fallthru
      _
    %v16 = vld [vmem:[%s0] sm:$0xf]
    %v17 = vld [vmem:[%s0 + $0x4] sm:$0xf]
    %v18 = vld [vmem:[%s0 + $0x8] sm:$0xf]
    %v19 = vld [vmem:[%s0 + $0xc] sm:$0xf]
    %v20 = vld [vmem:[%s0 + $0x10] sm:$0xf]
    %v21 = vld [vmem:[%s0 + $0x14] sm:$0xf]
    %v22 = vld [vmem:[%s0 + $0x18] sm:$0xf]
    %v23 = vld [vmem:[%s0 + $0x1c] sm:$0xf]
    %v24 = vld [vmem:[%s0 + $0x20] sm:$0xf]
    %v25 = vld [vmem:[%s0 + $0x24] sm:$0xf]
    %v26 = vld [vmem:[%s0 + $0x28] sm:$0xf]
    %v27 = vld [vmem:[%s0 + $0x2c] sm:$0xf]
    %v28 = vld [vmem:[%s0 + $0x30] sm:$0xf]
    %v29 = vld [vmem:[%s0 + $0x34] sm:$0xf]
    %v30 = vld [vmem:[%s0 + $0x38] sm:$0xf]
    %v31 = vld [vmem:[%s0 + $0x3c] sm:$0xf]
    %v32 = vld [vmem:[%s1] sm:$0xf]
    %v33 = vld [vmem:[%s1 + $0x4] sm:$0xf]
    %v34 = vld [vmem:[%s1 + $0x8] sm:$0xf]
    %v35 = vld [vmem:[%s1 + $0xc] sm:$0xf]
    %v36 = vld [vmem:[%s1 + $0x10] sm:$0xf]
    %v53 = vunpack.c.l.b16 %v16
    %v54 = vunpack.c.l.b16 %v17
    %v55 = vunpack.c.l.b16 %v18
    %v56 = vunpack.c.l.b16 %v19
    %v57 = vunpack.c.l.b16 %v20
    %v58 = vunpack.c.l.b16 %v21
    %v59 = vunpack.c.l.b16 %v22
    %v60 = vunpack.c.l.b16 %v23
    %v61 = vunpack.c.l.b16 %v24
    %v62 = vunpack.c.l.b16 %v25
    %v63 = vunpack.c.l.b16 %v26
    %v64 = vunpack.c.l.b16 %v27
    %v65 = vunpack.c.l.b16 %v28
    %v66 = vunpack.c.l.b16 %v29
    %v67 = vunpack.c.l.b16 %v30
    %v68 = vunpack.c.l.b16 %v31
    %v69 = vpack.c.b16 %v54, %v53
    %v70 = vpack.c.b16 %v56, %v55
    %v71 = vpack.c.b16 %v58, %v57
    %v72 = vpack.c.b16 %v60, %v59
    %v73 = vpack.c.b16 %v62, %v61
    %v74 = vpack.c.b16 %v64, %v63
    %v75 = vpack.c.b16 %v66, %v65
    %v76 = vpack.c.b16 %v68, %v67
    %v82 = vunpack.c.l.b16 %v32
    %v83 = vunpack.c.l.b16 %v33
    %v84 = vunpack.c.l.b16 %v34
    %v85 = vunpack.c.l.b16 %v35
    %v86 = vunpack.c.l.b16 %v36
    %v87 = vpack.c.b16 %v83, %v82
    %v88 = vpack.c.b16 %v85, %v84
    %v89 = vpack.c.b16 %v86, %v86
    %vm92 = vcmask 326656
    %v94 = vsel %vm92, %v69, 0
    %v97 = vsel %vm92, %v70, 0
    %v100 = vsel %vm92, %v71, 0
    %v103 = vsel %vm92, %v72, 0
    %v106 = vsel %vm92, %v73, 0
    %v109 = vsel %vm92, %v74, 0
    %v112 = vsel %vm92, %v75, 0
    %v115 = vsel %vm92, %v76, 0
    %vm117 = vcmask 1043456
    %v119 = vsel %vm117, %v89, 0
    %121 = vmatprep.subr.bf16.mxu0 0
    %122 = vmatpush1.bf16.msra.mxu0 %v87
    %123 = vmatprep.subr.bf16.mxu0 0
    %124 = vmatpush1.bf16.msra.mxu0 %v88
    %125 = vmatprep.subr.bf16.mxu0 0
    %126 = vmatpush1.bf16.msra.mxu0 %v119
    %127 = vmatprep.subr.bf16.mxu0 0
    %128 = vmatpush1.bf16.msra.mxu0 0
    %129 = vmatprep.subr.bf16.mxu0 0
    %130 = vmatpush1.bf16.msra.mxu0 0
    %131 = vmatprep.subr.bf16.mxu0 0
    %132 = vmatpush1.bf16.msra.mxu0 0
    %133 = vmatprep.subr.bf16.mxu0 0
    %134 = vmatpush1.bf16.msra.mxu0 0
    %135 = vmatprep.subr.bf16.mxu0 0
    %136 = vmatpush1.bf16.msra.mxu0 0
    %137 = vmatprep.subr.bf16.mxu0 0
    %138 = vmatpush1.bf16.msra.mxu0 0
    %139 = vmatprep.subr.bf16.mxu0 0
    %140 = vmatpush1.bf16.msra.mxu0 0
    %141 = vmatprep.subr.bf16.mxu0 0
    %142 = vmatpush1.bf16.msra.mxu0 0
    %143 = vmatprep.subr.bf16.mxu0 0
    %144 = vmatpush1.bf16.msra.mxu0 0
    %145 = vmatprep.subr.bf16.mxu0 0
    %146 = vmatpush1.bf16.msra.mxu0 0
    %147 = vmatprep.subr.bf16.mxu0 0
    %148 = vmatpush1.bf16.msra.mxu0 0
    %149 = vmatprep.subr.bf16.mxu0 0
    %150 = vmatpush1.bf16.msra.mxu0 0
    %151 = vmatprep.subr.bf16.mxu0 0
    %152 = vmatpush1.bf16.msra.mxu0 0
    %153 = vmatprep.mubr.bf16.mxu0 0
    %154 = vmatmul.mubr.bf16.gmra.mrb[0].mxu0 %v94
    %v155 = vpop.f32.mrb[0].mxu0
    %v156 = vadd.f32 0.0, %v155
    %v157 = vpop.f32.mrb[0].mxu0
    %v158 = vpop.f32.mrb[0].mxu0
    %v159 = vadd.f32 0.0, %v158
    %v160 = vpop.f32.mrb[0].mxu0
    %161 = vmatprep.mubr.bf16.mxu0 0
    %162 = vmatmul.mubr.bf16.gmra.mrb[0].mxu0 %v97
    %v163 = vpop.f32.mrb[0].mxu0
    %v164 = vadd.f32 0.0, %v163
    %v165 = vpop.f32.mrb[0].mxu0
    %v166 = vpop.f32.mrb[0].mxu0
    %v167 = vadd.f32 0.0, %v166
    %v168 = vpop.f32.mrb[0].mxu0
    %169 = vmatprep.mubr.bf16.mxu0 0
    %170 = vmatmul.mubr.bf16.gmra.mrb[0].mxu0 %v100
    %v171 = vpop.f32.mrb[0].mxu0
    %v172 = vadd.f32 0.0, %v171
    %v173 = vpop.f32.mrb[0].mxu0
    %v174 = vpop.f32.mrb[0].mxu0
    %v175 = vadd.f32 0.0, %v174
    %v176 = vpop.f32.mrb[0].mxu0
    %177 = vmatprep.mubr.bf16.mxu0 0
    %178 = vmatmul.mubr.bf16.gmra.mrb[0].mxu0 %v103
    %v179 = vpop.f32.mrb[0].mxu0
    %v180 = vadd.f32 0.0, %v179
    %v181 = vpop.f32.mrb[0].mxu0
    %v182 = vpop.f32.mrb[0].mxu0
    %v183 = vadd.f32 0.0, %v182
    %v184 = vpop.f32.mrb[0].mxu0
    %185 = vmatprep.mubr.bf16.mxu0 0
    %186 = vmatmul.mubr.bf16.gmra.mrb[0].mxu0 %v106
    %v187 = vpop.f32.mrb[0].mxu0
    %v188 = vadd.f32 0.0, %v187
    %v189 = vpop.f32.mrb[0].mxu0
    %v190 = vpop.f32.mrb[0].mxu0
    %v191 = vadd.f32 0.0, %v190
    %v192 = vpop.f32.mrb[0].mxu0
    %193 = vmatprep.mubr.bf16.mxu0 0
    %194 = vmatmul.mubr.bf16.gmra.mrb[0].mxu0 %v109
    %v195 = vpop.f32.mrb[0].mxu0
    %v196 = vadd.f32 0.0, %v195
    %v197 = vpop.f32.mrb[0].mxu0
    %v198 = vpop.f32.mrb[0].mxu0
    %v199 = vadd.f32 0.0, %v198
    %v200 = vpop.f32.mrb[0].mxu0
    %201 = vmatprep.mubr.bf16.mxu0 0
    %202 = vmatmul.mubr.bf16.gmra.mrb[0].mxu0 %v112
    %v203 = vpop.f32.mrb[0].mxu0
    %v204 = vadd.f32 0.0, %v203
    %v205 = vpop.f32.mrb[0].mxu0
    %v206 = vpop.f32.mrb[0].mxu0
    %v207 = vadd.f32 0.0, %v206
    %v208 = vpop.f32.mrb[0].mxu0
    %209 = vmatprep.mubr.bf16.mxu0 0
    %210 = vmatmul.mubr.bf16.gmra.mrb[0].mxu0 %v115
    %v211 = vpop.f32.mrb[0].mxu0
    %v212 = vadd.f32 0.0, %v211
    %v213 = vpop.f32.mrb[0].mxu0
    %v214 = vpop.f32.mrb[0].mxu0
    %v215 = vadd.f32 0.0, %v214
    %v216 = vpop.f32.mrb[0].mxu0
    %217 = vdwg.mxu0
    %218 = vst [vmem:[#allocation2] sm:$0xff] %v156
    %219 = vst [vmem:[#allocation2 + $0x8] sm:$0xff] %v159
    %220 = vst [vmem:[#allocation2 + $0x10] sm:$0xff] %v164
    %221 = vst [vmem:[#allocation2 + $0x18] sm:$0xff] %v167
    %222 = vst [vmem:[#allocation2 + $0x20] sm:$0xff] %v172
    %223 = vst [vmem:[#allocation2 + $0x28] sm:$0xff] %v175
    %224 = vst [vmem:[#allocation2 + $0x30] sm:$0xff] %v180
    %225 = vst [vmem:[#allocation2 + $0x38] sm:$0xff] %v183
    %226 = vst [vmem:[#allocation2 + $0x40] sm:$0xff] %v188
    %227 = vst [vmem:[#allocation2 + $0x48] sm:$0xff] %v191
    %228 = vst [vmem:[#allocation2 + $0x50] sm:$0xff] %v196
    %229 = vst [vmem:[#allocation2 + $0x58] sm:$0xff] %v199
    %230 = vst [vmem:[#allocation2 + $0x60] sm:$0xff] %v204
    %231 = vst [vmem:[#allocation2 + $0x68] sm:$0xff] %v207
    %232 = vst [vmem:[#allocation2 + $0x70] sm:$0xff] %v212
    %233 = vst [vmem:[#allocation2 + $0x78] sm:$0xff] %v215
    %v234 = vadd.f32 %v156, %v159
    %v235 = vadd.f32 %v234, %v164
    %v236 = vadd.f32 %v235, %v167
    %v237 = vadd.f32 %v236, %v172
    %v238 = vadd.f32 %v237, %v175
    %v239 = vadd.f32 %v238, %v180
    %v240 = vadd.f32 %v239, %v183
    %v241 = vadd.f32 %v240, %v188
    %v242 = vadd.f32 %v241, %v191
    %v243 = vadd.f32 %v242, %v196
    %v244 = vadd.f32 %v243, %v199
    %v245 = vadd.f32 %v244, %v204
    %v246 = vadd.f32 %v245, %v207
    %v247 = vadd.f32 %v246, %v212
    %v248 = vadd.f32 %v247, %v215
    %v249 = vrot.slane %v248, 4
    %v250 = vadd.f32 %v248, %v249
    %v251 = vrot.slane %v250, 2
    %v252 = vadd.f32 %v250, %v251
    %v253 = vrot.slane %v252, 1
    %v254 = vadd.f32 %v252, %v253
    %v255 = vmul.f32 %v156, %v156
    %v256 = vmul.f32 %v159, %v159
    %v257 = vmul.f32 %v164, %v164
    %v258 = vmul.f32 %v167, %v167
    %v259 = vmul.f32 %v172, %v172
    %v260 = vmul.f32 %v175, %v175
    %v261 = vmul.f32 %v180, %v180
    %v262 = vmul.f32 %v183, %v183
    %v263 = vmul.f32 %v188, %v188
    %v264 = vmul.f32 %v191, %v191
    %v265 = vmul.f32 %v196, %v196
    %v266 = vmul.f32 %v199, %v199
    %v267 = vmul.f32 %v204, %v204
    %v268 = vmul.f32 %v207, %v207
    %v269 = vmul.f32 %v212, %v212
    %v270 = vmul.f32 %v215, %v215
    %v271 = vadd.f32 %v255, %v256
    %v272 = vadd.f32 %v271, %v257
    %v273 = vadd.f32 %v272, %v258
    %v274 = vadd.f32 %v273, %v259
    %v275 = vadd.f32 %v274, %v260
    %v276 = vadd.f32 %v275, %v261
    %v277 = vadd.f32 %v276, %v262
    %v278 = vadd.f32 %v277, %v263
    %v279 = vadd.f32 %v278, %v264
    %v280 = vadd.f32 %v279, %v265
    %v281 = vadd.f32 %v280, %v266
    %v282 = vadd.f32 %v281, %v267
    %v283 = vadd.f32 %v282, %v268
    %v284 = vadd.f32 %v283, %v269
    %v285 = vadd.f32 %v284, %v270
    %v286 = vrot.slane %v285, 4
    %v287 = vadd.f32 %v285, %v286
    %v288 = vrot.slane %v287, 2
    %v289 = vadd.f32 %v287, %v288
    %v290 = vrot.slane %v289, 1
    %v291 = vadd.f32 %v289, %v290
    %v292 = vlaneseq
    %v293 = vshrl.u32 %v292, 7
    %vm294 = vcmp.eq.s32.totalorder %v293, 0
    %v295 = vsel %vm294, %v254, 0.0
    %vm296 = vcmp.eq.s32.totalorder %v293, 1
    %v297 = vsel %vm296, %v291, 0.0
    %v298 = vadd.f32 %v295, %v297
    %299 = vst [vmem:[#allocation4] sm:$0xff] %v298
    // Predicated region
    $region10: #{tpu_custom_call.1} parent=1 // pred_check
      _
    $region11: #{tpu_custom_call.1} parent=1 // pred_check_branch
      %301 = sbr.rel (0) target = $region13
    $region12: #{tpu_custom_call.1} parent=1 // pred_region
      %s303 = ssub.s32 2048, 2048
      %304 = vsyncadd [#allocation3], %s303
      %s305 = sshll.u32 [#allocation2], 4
      %s306 = int_to_ptr.vmem [resolvable:$true] %s305
      %311 = dma.vmem_to_hbm [thread:$0]  %s306, 2048, %s2, [#allocation3], 128, 128, 8
    $region13: #{tpu_custom_call.1} parent=1 // pred_fallthru
      _
    // Predicated region
    $region14: #{tpu_custom_call.1} parent=1 // pred_check
      _
    $region15: #{tpu_custom_call.1} parent=1 // pred_check_branch
      %313 = sbr.rel (0) target = $region17
    $region16: #{tpu_custom_call.1} parent=1 // pred_region
      %s315 = ssub.s32 128, 128
      %316 = vsyncadd [#allocation5], %s315
      %s318 = sshll.u32 [#allocation4], 4
      %s319 = int_to_ptr.vmem [resolvable:$true] %s318
      %321 = dma.vmem_to_hbm [thread:$0]  %s319, 128, %s3, [#allocation5]
    $region17: #{tpu_custom_call.1} parent=1 // pred_fallthru
      _
    // Predicated region
    $region18: #{tpu_custom_call.1} parent=1 // pred_check
      _
    $region19: #{tpu_custom_call.1} parent=1 // pred_check_branch
      %323 = sbr.rel (0) target = $region21
    $region20: #{tpu_custom_call.1} parent=1 // pred_region
      %324 = dma.done [#allocation3], 2048
    $region21: #{tpu_custom_call.1} parent=1 // pred_fallthru
      _
    // Predicated region
    $region22: #{tpu_custom_call.1} parent=1 // pred_check
      _
    $region23: #{tpu_custom_call.1} parent=1 // pred_check_branch
      %326 = sbr.rel (0) target = $region25
    $region24: #{tpu_custom_call.1} parent=1 // pred_region
      %327 = dma.done [#allocation5], 128
    $region25: #{tpu_custom_call.1} parent=1 // pred_fallthru
      _
    %328 = vsyncpa [#allocation3], 1
    %329 = vsyncpa [#allocation5], 1

</llo_original>
